<compile_context>
chip_gen: v5e
topology: v5e:2x2
jax: 0.10.0
libtpu: 0.0.40
codegen_flags: <defaults>
</compile_context>

<pallas_src>
import functools

import jax
import jax.numpy as jnp
from jax.experimental import pallas as pl
from jax.experimental.pallas import tpu as pltpu

_EPS2 = 1e-24  # (1e-12)**2 : F.normalize's eps applied on the squared norm.


def _l2_scale(x, scale=None):
    # x * scale / max(||x||, 1e-12)  ==  x * (scale * rsqrt(max(||x||^2, 1e-24)))
    ss = jnp.sum(x * x, axis=1, keepdims=True)
    inv = jax.lax.rsqrt(jnp.maximum(ss, jnp.float32(_EPS2)))
    if scale is not None:
        inv = inv * jnp.float32(scale)
    return x * inv


def _mnrl_kernel(q_ref, p_ref, n_ref, loss_ref,
                 qs_ref, m_ref, l_ref, diag_ref,
                 *, scale, cos_sim, mxu_dtype):
    k = pl.program_id(0)

    def _mm(a, b):
        # scores = a @ b.T without an explicit transpose: contract last axes.
        if mxu_dtype is not None:
            a = a.astype(mxu_dtype)
            b = b.astype(mxu_dtype)
        return jax.lax.dot_general(
            a, b,
            dimension_numbers=(((1,), (1,)), ((), ())),
            preferred_element_type=jnp.float32)

    # ---- step 0: normalize/scale the query, handle the positive block --------
    @pl.when(k == 0)
    def _():
        q = q_ref[...].astype(jnp.float32)
        p = p_ref[...].astype(jnp.float32)
        if cos_sim:
            qs = _l2_scale(q, scale)      # scale folded into the query rows
            pn = _l2_scale(p)
        else:
            qs = q * jnp.float32(scale)
            pn = p
        qs_ref[...] = qs
        # Positives occupy score columns 0..B-1, so the label diagonal is just
        # the row-wise dot product of (scaled) query and positive.
        diag_ref[...] = jnp.sum(qs * pn, axis=1, keepdims=True)
        s_pos = _mm(qs, pn)                                   # [B, B]
        m0 = jnp.max(s_pos, axis=1, keepdims=True)
        m_ref[...] = m0
        l_ref[...] = jnp.sum(jnp.exp(s_pos - m0), axis=1, keepdims=True)

    # ---- every step: one tile of the negative pool, online-softmax update ----
    n = n_ref[...].astype(jnp.float32)
    nn = _l2_scale(n) if cos_sim else n
    s_neg = _mm(qs_ref[...], nn)                              # [B, block_n]

    m_prev = m_ref[...]
    l_prev = l_ref[...]
    m_new = jnp.maximum(m_prev, jnp.max(s_neg, axis=1, keepdims=True))
    l_ref[...] = (l_prev * jnp.exp(m_prev - m_new)
                  + jnp.sum(jnp.exp(s_neg - m_new), axis=1, keepdims=True))
    m_ref[...] = m_new

    # ---- last step: mean cross-entropy with labels = arange(B) --------------
    @pl.when(k == pl.num_programs(0) - 1)
    def _():
        lse = jnp.log(l_ref[...]) + m_ref[...]
        loss_ref[0, 0] = jnp.mean(lse - diag_ref[...])


def _pick_block_n(bn, block_n, max_block=1024):
    if block_n is not None:
        assert block_n == bn or (block_n % 8 == 0 and bn % block_n == 0), (
            "block_n must divide the negative count and be a multiple of 8")
        return block_n
    if bn <= max_block:
        return bn
    t = max_block - (max_block % 8)
    while t >= 8:
        if bn % t == 0:
            return t
        t -= 8
    return bn  # no nice divisor: fall back to a single tile


def multiple_negatives_ranking_loss(query, positive, negative, scale=20.0,
                                    distance="cos_sim", block_n=None,
                                    mxu_dtype=None):
    assert distance in ("dot", "cos_sim"), "wrong value for distance"
    b, d = query.shape
    bp, dp = positive.shape
    bn, dn = negative.shape
    assert bp == b and dp == d and dn == d

    tn = _pick_block_n(bn, block_n)
    grid = (bn // tn,)

    kernel = functools.partial(
        _mnrl_kernel,
        scale=float(scale),
        cos_sim=(distance == "cos_sim"),
        mxu_dtype=mxu_dtype)

    # Rough VMEM footprint: double-buffered inputs + scratch + score tiles.
    est_bytes = 4 * (2 * (b * d + b * d + tn * d)
                     + b * d + 3 * b
                     + 2 * b * max(b, tn))
    vmem_limit = None
    if est_bytes > 24 * 1024 * 1024:
        # TODO(synk): on v7x (64 MiB VMEM) prefer shrinking block_n over this.
        vmem_limit = min(int(est_bytes * 3 // 2), 96 * 1024 * 1024)

    out = pl.pallas_call(
        kernel,
        out_shape=jax.ShapeDtypeStruct((1, 1), jnp.float32),
        grid_spec=pltpu.PrefetchScalarGridSpec(
            num_scalar_prefetch=0,
            grid=grid,
            in_specs=[
                pl.BlockSpec((b, d), lambda k: (0, 0)),   # query   (resident)
                pl.BlockSpec((b, d), lambda k: (0, 0)),   # positive (resident)
                pl.BlockSpec((tn, d), lambda k: (k, 0)),  # negative tile
            ],
            out_specs=pl.BlockSpec(memory_space=pltpu.MemorySpace.SMEM),
            scratch_shapes=[
                pltpu.VMEM((b, d), jnp.float32),  # scaled / normalized query
                pltpu.VMEM((b, 1), jnp.float32),  # running row max
                pltpu.VMEM((b, 1), jnp.float32),  # running row sum
                pltpu.VMEM((b, 1), jnp.float32),  # label-diagonal scores
            ]),
        compiler_params=pltpu.CompilerParams(
            dimension_semantics=("arbitrary",),
            vmem_limit_bytes=vmem_limit),
    )(query, positive, negative)
    return out[0, 0]


def _reference_loss(query, positive, negative, scale=20.0, distance="cos_sim"):
    # Pure-JAX reference matching the PyTorch forward.
    docs = jnp.concatenate([positive, negative], axis=0)
    if distance == "cos_sim":
        q = query / jnp.maximum(jnp.linalg.norm(query, axis=1, keepdims=True), 1e-12)
        dv = docs / jnp.maximum(jnp.linalg.norm(docs, axis=1, keepdims=True), 1e-12)
    else:
        q, dv = query, docs
    scores = q @ dv.T * scale
    labels = jnp.arange(scores.shape[0])
    logp = jax.nn.log_softmax(scores, axis=1)
    return -jnp.mean(logp[labels, labels])


if __name__ == "__main__":
    B, D, BN = 8, 32, 16  # small synthetic shapes; BN=16 + block_n=8 -> 2 grid steps
    key = jax.random.PRNGKey(0)
    kq, kp, kn = jax.random.split(key, 3)
    query = jax.random.normal(kq, (B, D), dtype=jnp.float32)
    positive = jax.random.normal(kp, (B, D), dtype=jnp.float32)
    negative = jax.random.normal(kn, (BN, D), dtype=jnp.float32)

    loss = multiple_negatives_ranking_loss(query, positive, negative,
                                           scale=20.0, distance="cos_sim",
                                           block_n=8)
    jax.block_until_ready(loss)
    ref = _reference_loss(query, positive, negative, scale=20.0,
                          distance="cos_sim")
    assert jnp.allclose(loss, ref, rtol=1e-4, atol=1e-5), (loss, ref)

    loss_dot = multiple_negatives_ranking_loss(query, positive, negative,
                                               scale=20.0, distance="dot",
                                               block_n=8)
    jax.block_until_ready(loss_dot)
    ref_dot = _reference_loss(query, positive, negative, scale=20.0,
                              distance="dot")
    assert jnp.allclose(loss_dot, ref_dot, rtol=1e-4, atol=1e-5), (loss_dot, ref_dot)

    print("KERNEL_OK")
</pallas_src>

<mosaic_0001>
module attributes {stable_mosaic.version = 11 : i64} {
  func.func @_mnrl_kernel(%arg0: i32, %arg1: memref<8x32xf32, #tpu.memory_space<vmem>>, %arg2: memref<8x32xf32, #tpu.memory_space<vmem>>, %arg3: memref<8x32xf32, #tpu.memory_space<vmem>>, %arg4: memref<1x1xf32, #tpu.memory_space<smem>>, %arg5: memref<8x32xf32, #tpu.memory_space<vmem>>, %arg6: memref<8x1xf32, #tpu.memory_space<vmem>>, %arg7: memref<8x1xf32, #tpu.memory_space<vmem>>, %arg8: memref<8x1xf32, #tpu.memory_space<vmem>>) attributes {dimension_semantics = [#tpu.dimension_semantics<arbitrary>], iteration_bounds = array<i64: 2>, scalar_prefetch = 0 : i64, scratch_operands = 4 : i64, tpu.core_type = #tpu.core_type<tc>, window_params = [{pipeline_mode = #tpu.pipeline_mode<synchronous>, transform_indices = @transform_0, window_bounds = array<i64: 8, 32>}, {pipeline_mode = #tpu.pipeline_mode<synchronous>, transform_indices = @transform_1, window_bounds = array<i64: 8, 32>}, {transform_indices = @transform_2, window_bounds = array<i64: 8, 32>}, {transform_indices = @transform_3, window_bounds = array<i64: 1, 1>}]} {
    %c0_i32 = arith.constant 0 : i32
    %0 = arith.cmpi eq, %arg0, %c0_i32 : i32
    %1 = arith.extui %0 : i1 to i32
    %c0_i32_0 = arith.constant 0 : i32
    %2 = arith.cmpi ne, %1, %c0_i32_0 : i32
    scf.if %2 {
      %c0_17 = arith.constant 0 : index
      %c0_18 = arith.constant 0 : index
      %33 = vector.load %arg1[%c0_17, %c0_18] : memref<8x32xf32, #tpu.memory_space<vmem>>, vector<8x32xf32>
      %c0_19 = arith.constant 0 : index
      %c0_20 = arith.constant 0 : index
      %34 = vector.load %arg2[%c0_19, %c0_20] : memref<8x32xf32, #tpu.memory_space<vmem>>, vector<8x32xf32>
      %35 = arith.mulf %33, %33 : vector<8x32xf32>
      %cst_21 = arith.constant dense<0.000000e+00> : vector<8xf32>
      %36 = vector.multi_reduction <add>, %35, %cst_21 [1] : vector<8x32xf32> to vector<8xf32>
      %37 = vector.shape_cast %36 : vector<8xf32> to vector<8x1xf32>
      %cst_22 = arith.constant 1.000000e-24 : f32
      %38 = vector.broadcast %cst_22 : f32 to vector<8x1xf32>
      %39 = arith.maximumf %37, %38 : vector<8x1xf32>
      %40 = math.rsqrt %39 : vector<8x1xf32>
      %cst_23 = arith.constant 2.000000e+01 : f32
      %41 = vector.broadcast %cst_23 : f32 to vector<8x1xf32>
      %42 = arith.mulf %40, %41 : vector<8x1xf32>
      %43 = vector.broadcast %42 : vector<8x1xf32> to vector<8x32xf32>
      %44 = arith.mulf %33, %43 : vector<8x32xf32>
      %45 = arith.mulf %34, %34 : vector<8x32xf32>
      %cst_24 = arith.constant dense<0.000000e+00> : vector<8xf32>
      %46 = vector.multi_reduction <add>, %45, %cst_24 [1] : vector<8x32xf32> to vector<8xf32>
      %47 = vector.shape_cast %46 : vector<8xf32> to vector<8x1xf32>
      %cst_25 = arith.constant 1.000000e-24 : f32
      %48 = vector.broadcast %cst_25 : f32 to vector<8x1xf32>
      %49 = arith.maximumf %47, %48 : vector<8x1xf32>
      %50 = math.rsqrt %49 : vector<8x1xf32>
      %51 = vector.broadcast %50 : vector<8x1xf32> to vector<8x32xf32>
      %52 = arith.mulf %34, %51 : vector<8x32xf32>
      %c0_26 = arith.constant 0 : index
      %c0_27 = arith.constant 0 : index
      %53 = vector.load %arg5[%c0_26, %c0_27] : memref<8x32xf32, #tpu.memory_space<vmem>>, vector<8x32xf32>
      tpu.vector_store %arg5[%c0_26, %c0_27], %44 {strides = array<i32>} : memref<8x32xf32, #tpu.memory_space<vmem>>, vector<8x32xf32>,
      %54 = arith.mulf %44, %52 : vector<8x32xf32>
      %cst_28 = arith.constant dense<0.000000e+00> : vector<8xf32>
      %55 = vector.multi_reduction <add>, %54, %cst_28 [1] : vector<8x32xf32> to vector<8xf32>
      %56 = vector.shape_cast %55 : vector<8xf32> to vector<8x1xf32>
      %c0_29 = arith.constant 0 : index
      %c0_30 = arith.constant 0 : index
      %57 = vector.load %arg8[%c0_29, %c0_30] : memref<8x1xf32, #tpu.memory_space<vmem>>, vector<8x1xf32>
      tpu.vector_store %arg8[%c0_29, %c0_30], %56 {strides = array<i32>} : memref<8x1xf32, #tpu.memory_space<vmem>>, vector<8x1xf32>,
      %cst_31 = arith.constant dense<0.000000e+00> : vector<8x8xf32>
      %58 = tpu.matmul %44, %52, %cst_31 {dimension_numbers = #tpu.dot_dimension_numbers<[1], [1], [0], [0], [0, 0, 1, 0], [], []>} : vector<8x32xf32>, vector<8x32xf32>, vector<8x8xf32> -> vector<8x8xf32>
      %cst_32 = arith.constant dense<0xFF800000> : vector<8xf32>
      %59 = vector.multi_reduction <maximumf>, %58, %cst_32 [1] : vector<8x8xf32> to vector<8xf32>
      %60 = vector.shape_cast %59 : vector<8xf32> to vector<8x1xf32>
      %c0_33 = arith.constant 0 : index
      %c0_34 = arith.constant 0 : index
      %61 = vector.load %arg6[%c0_33, %c0_34] : memref<8x1xf32, #tpu.memory_space<vmem>>, vector<8x1xf32>
      tpu.vector_store %arg6[%c0_33, %c0_34], %60 {strides = array<i32>} : memref<8x1xf32, #tpu.memory_space<vmem>>, vector<8x1xf32>,
      %62 = vector.broadcast %60 : vector<8x1xf32> to vector<8x8xf32>
      %63 = arith.subf %58, %62 : vector<8x8xf32>
      %64 = math.exp %63 : vector<8x8xf32>
      %cst_35 = arith.constant dense<0.000000e+00> : vector<8xf32>
      %65 = vector.multi_reduction <add>, %64, %cst_35 [1] : vector<8x8xf32> to vector<8xf32>
      %66 = vector.shape_cast %65 : vector<8xf32> to vector<8x1xf32>
      %c0_36 = arith.constant 0 : index
      %c0_37 = arith.constant 0 : index
      %67 = vector.load %arg7[%c0_36, %c0_37] : memref<8x1xf32, #tpu.memory_space<vmem>>, vector<8x1xf32>
      tpu.vector_store %arg7[%c0_36, %c0_37], %66 {strides = array<i32>} : memref<8x1xf32, #tpu.memory_space<vmem>>, vector<8x1xf32>,
    } else {
    }
    %c0 = arith.constant 0 : index
    %c0_1 = arith.constant 0 : index
    %3 = vector.load %arg3[%c0, %c0_1] : memref<8x32xf32, #tpu.memory_space<vmem>>, vector<8x32xf32>
    %4 = arith.mulf %3, %3 : vector<8x32xf32>
    %cst = arith.constant dense<0.000000e+00> : vector<8xf32>
    %5 = vector.multi_reduction <add>, %4, %cst [1] : vector<8x32xf32> to vector<8xf32>
    %6 = vector.shape_cast %5 : vector<8xf32> to vector<8x1xf32>
    %cst_2 = arith.constant 1.000000e-24 : f32
    %7 = vector.broadcast %cst_2 : f32 to vector<8x1xf32>
    %8 = arith.maximumf %6, %7 : vector<8x1xf32>
    %9 = math.rsqrt %8 : vector<8x1xf32>
    %10 = vector.broadcast %9 : vector<8x1xf32> to vector<8x32xf32>
    %11 = arith.mulf %3, %10 : vector<8x32xf32>
    %c0_3 = arith.constant 0 : index
    %c0_4 = arith.constant 0 : index
    %12 = vector.load %arg5[%c0_3, %c0_4] : memref<8x32xf32, #tpu.memory_space<vmem>>, vector<8x32xf32>
    %cst_5 = arith.constant dense<0.000000e+00> : vector<8x8xf32>
    %13 = tpu.matmul %12, %11, %cst_5 {dimension_numbers = #tpu.dot_dimension_numbers<[1], [1], [0], [0], [0, 0, 1, 0], [], []>} : vector<8x32xf32>, vector<8x32xf32>, vector<8x8xf32> -> vector<8x8xf32>
    %c0_6 = arith.constant 0 : index
    %c0_7 = arith.constant 0 : index
    %14 = vector.load %arg6[%c0_6, %c0_7] : memref<8x1xf32, #tpu.memory_space<vmem>>, vector<8x1xf32>
    %c0_8 = arith.constant 0 : index
    %c0_9 = arith.constant 0 : index
    %15 = vector.load %arg7[%c0_8, %c0_9] : memref<8x1xf32, #tpu.memory_space<vmem>>, vector<8x1xf32>
    %cst_10 = arith.constant dense<0xFF800000> : vector<8xf32>
    %16 = vector.multi_reduction <maximumf>, %13, %cst_10 [1] : vector<8x8xf32> to vector<8xf32>
    %17 = vector.shape_cast %16 : vector<8xf32> to vector<8x1xf32>
    %18 = arith.maximumf %14, %17 : vector<8x1xf32>
    %19 = arith.subf %14, %18 : vector<8x1xf32>
    %20 = math.exp %19 : vector<8x1xf32>
    %21 = arith.mulf %15, %20 : vector<8x1xf32>
    %22 = vector.broadcast %18 : vector<8x1xf32> to vector<8x8xf32>
    %23 = arith.subf %13, %22 : vector<8x8xf32>
    %24 = math.exp %23 : vector<8x8xf32>
    %cst_11 = arith.constant dense<0.000000e+00> : vector<8xf32>
    %25 = vector.multi_reduction <add>, %24, %cst_11 [1] : vector<8x8xf32> to vector<8xf32>
    %26 = vector.shape_cast %25 : vector<8xf32> to vector<8x1xf32>
    %27 = arith.addf %21, %26 : vector<8x1xf32>
    %c0_12 = arith.constant 0 : index
    %c0_13 = arith.constant 0 : index
    %28 = vector.load %arg7[%c0_12, %c0_13] : memref<8x1xf32, #tpu.memory_space<vmem>>, vector<8x1xf32>
    tpu.vector_store %arg7[%c0_12, %c0_13], %27 {strides = array<i32>} : memref<8x1xf32, #tpu.memory_space<vmem>>, vector<8x1xf32>,
    %c0_14 = arith.constant 0 : index
    %c0_15 = arith.constant 0 : index
    %29 = vector.load %arg6[%c0_14, %c0_15] : memref<8x1xf32, #tpu.memory_space<vmem>>, vector<8x1xf32>
    tpu.vector_store %arg6[%c0_14, %c0_15], %18 {strides = array<i32>} : memref<8x1xf32, #tpu.memory_space<vmem>>, vector<8x1xf32>,
    %c1_i32 = arith.constant 1 : i32
    %30 = arith.cmpi eq, %arg0, %c1_i32 : i32
    %31 = arith.extui %30 : i1 to i32
    %c0_i32_16 = arith.constant 0 : i32
    %32 = arith.cmpi ne, %31, %c0_i32_16 : i32
    scf.if %32 {
      %c0_17 = arith.constant 0 : index
      %c0_18 = arith.constant 0 : index
      %33 = vector.load %arg7[%c0_17, %c0_18] : memref<8x1xf32, #tpu.memory_space<vmem>>, vector<8x1xf32>
      %34 = math.log %33 : vector<8x1xf32>
      %c0_19 = arith.constant 0 : index
      %c0_20 = arith.constant 0 : index
      %35 = vector.load %arg6[%c0_19, %c0_20] : memref<8x1xf32, #tpu.memory_space<vmem>>, vector<8x1xf32>
      %36 = arith.addf %34, %35 : vector<8x1xf32>
      %c0_21 = arith.constant 0 : index
      %c0_22 = arith.constant 0 : index
      %37 = vector.load %arg8[%c0_21, %c0_22] : memref<8x1xf32, #tpu.memory_space<vmem>>, vector<8x1xf32>
      %38 = arith.subf %36, %37 : vector<8x1xf32>
      %39 = vector.shape_cast %38 : vector<8x1xf32> to vector<1x8x1xf32>
      %cst_23 = arith.constant dense<0.000000e+00> : vector<1xf32>
      %40 = vector.multi_reduction <add>, %39, %cst_23 [1, 2] : vector<1x8x1xf32> to vector<1xf32>
      %41 = vector.shape_cast %40 : vector<1xf32> to vector<1x1x1xf32>
      %42 = vector.extract %41[0, 0, 0] : f32 from vector<1x1x1xf32>
      %cst_24 = arith.constant 8.000000e+00 : f32
      %43 = arith.divf %42, %cst_24 : f32
      %c0_25 = arith.constant 0 : index
      %c0_26 = arith.constant 0 : index
      %44 = memref.load %arg4[%c0_25, %c0_26] : memref<1x1xf32, #tpu.memory_space<smem>>
      memref.store %43, %arg4[%c0_25, %c0_26] : memref<1x1xf32, #tpu.memory_space<smem>>
    } else {
    }
    return
  }
  func.func @transform_0(%arg0: i32) -> (i32, i32) {
    %c0_i32 = arith.constant 0 : i32
    %c0_i32_0 = arith.constant 0 : i32
    %c0_i32_1 = arith.constant 0 : i32
    return %c0_i32, %c0_i32_0 : i32, i32
  }
  func.func @transform_1(%arg0: i32) -> (i32, i32) {
    %c0_i32 = arith.constant 0 : i32
    %c0_i32_0 = arith.constant 0 : i32
    %c0_i32_1 = arith.constant 0 : i32
    return %c0_i32, %c0_i32_0 : i32, i32
  }
  func.func @transform_2(%arg0: i32) -> (i32, i32) {
    %c0_i32 = arith.constant 0 : i32
    %c0_i32_0 = arith.constant 0 : i32
    return %arg0, %c0_i32 : i32, i32
  }
  func.func @transform_3(%arg0: i32) -> (i32, i32) {
    %c0_i32 = arith.constant 0 : i32
    %c0_i32_0 = arith.constant 0 : i32
    %c0_i32_1 = arith.constant 0 : i32
    return %c0_i32, %c0_i32_0 : i32, i32
  }
}

</mosaic_0001>

<llo_original>
// kernel: tpu_custom_call.1
$region0: #{tpu_custom_call.1}
  #allocation0 [shape = 'u32[]', space=smem, size = 0x4, offset = 0x4, fixed_abs, tag = 'smem constant byte address 0x4 - core index']
  #allocation1 [shape = 'u32[72,128]{1,0:T(1,128)}', space=vmem, size = 0x9000, scoped, tag = 'internal scratch']
  #allocation2 [shape = 'f32[8,32]{1,0:T(8,128)}', space=vmem, size = 0x1000, scoped, tag = 'scratch operand']
  #allocation3 [shape = 'f32[8,1]{1,0:T(8,128)}', space=vmem, size = 0x1000, scoped, tag = 'scratch operand']
  #allocation4 [shape = 'f32[8,1]{1,0:T(8,128)}', space=vmem, size = 0x1000, scoped, tag = 'scratch operand']
  #allocation5 [shape = 'f32[8,1]{1,0:T(8,128)}', space=vmem, size = 0x1000, scoped, tag = 'scratch operand']
  %s0 = inlined_call_operand.hbm [shape: f32[8,32], index: 0, kind: input, shape index: {}]
  %s1 = inlined_call_operand.hbm [shape: f32[8,32], index: 1, kind: input, shape index: {}]
  %s2 = inlined_call_operand.hbm [shape: f32[16,32], index: 2, kind: input, shape index: {}]
  %s3 = inlined_call_operand.hbm [shape: f32[1,1], index: 3, kind: output, shape index: {}]
  %s4 = sld [smem:[#allocation0]]
  $region65: #{tpu_custom_call.1} parent=0
    _
  %s6 = ssub.s32 1, %s4
  %s7 = scalar_select 0, %s6, %s4
  $region1: #{tpu_custom_call.1} parent=0
    #allocation6 [shape = 'u8[4096]{0}', space=vmem, size = 0x1000, scoped, tag = 'input window, operand 0, single buffered']
    #allocation7 [shape = 's32[2]{0}', space=sflag, size = 0x8, scoped, tag = 'scoped memory for tpu_custom_call.1']
    #allocation8 [shape = 's32[2]{0}', space=sflag, size = 0x8, scoped, tag = 'scoped memory for tpu_custom_call.1']
    #allocation9 [shape = 'u8[4096]{0}', space=vmem, size = 0x1000, scoped, tag = 'input window, operand 1, single buffered']
    #allocation10 [shape = 's32[1]{0}', space=sflag, size = 0x4, scoped, tag = 'scoped memory for tpu_custom_call.1']
    #allocation11 [shape = 'u8[8192]{0}', space=vmem, size = 0x2000, scoped, tag = 'input window, operand 2']
    #allocation12 [shape = 'u8[512]{0}', space=smem, size = 0x200, scoped, tag = 'output window, operand 0, single buffered']
    %8 = vsyncpa [#allocation7], 0
    %9 = vsyncpa [#allocation10], 0
    %10 = vsyncpa [#allocation8], 0
    loop: start=0, step=1, limit=4
    $region2: #{tpu_custom_call.1} parent=1 // loop_pre_header
      _
    $region3: #{tpu_custom_call.1} parent=1 // loop_header
      %s12 = sphi 0, %s16
      %p13 = scmp.ge.s32.totalorder %s12, 4
      %s20 = sphi 0, %s20
      %s22 = sphi 0, %s20
      %s23 = sphi 0, %s22
      %s37 = sphi 0, %s23
      %s41 = sphi 0, %s41
      %s43 = sphi 0, %s41
      %s44 = sphi 0, %s43
      %s58 = sphi 0, %s44
      %s64 = sphi 0, %s66
      %s67 = sphi 0, %s64
      %s68 = sphi 0, %s67
      %s84 = sphi 0, %s68
      %s88 = sphi 0, %s88
      %s90 = sphi 0, %s88
      %s91 = sphi 0, %s90
      %s105 = sphi 0, %s91
    $region4: #{tpu_custom_call.1} parent=1 // loop_header_branch
      %15 = sbr.rel (%p13) target = $region8
    $region5: #{tpu_custom_call.1} parent=1 // loop_body
      %s17 = ssub.s32 %s12, 1
      %s18 = ssub.s32 %s12, 2
      %s19 = sadd.s32 %s12, 1
      %s21 = sadd.s32 %s20, 1
      %p24 = scmp.eq.s32.totalorder %s12, 1
      %p25 = scmp.ne.s32.totalorder %s20, %s22
      %p26 = scmp.eq.s32.totalorder %s12, 0
      %p27 = por %p25, %p26
      %p28 = scmp.ne.s32.totalorder %s20, %s22
      %p29 = scmp.eq.s32.totalorder %s17, 1
      %p30 = por %p28, %p29
      %p31 = scmp.ne.s32.totalorder %s22, %s23
      %p32 = scmp.eq.s32.totalorder %s17, 0
      %p33 = por %p31, %p32
      %p34 = scmp.ne.s32.totalorder %s22, %s23
      %p35 = scmp.eq.s32.totalorder %s18, 1
      %p36 = por %p34, %p35
      %p38 = scmp.ne.s32.totalorder %s23, %s37
      %p39 = scmp.eq.s32.totalorder %s18, 0
      %p40 = por %p38, %p39
      %s42 = sadd.s32 %s41, 1
      %p45 = scmp.eq.s32.totalorder %s12, 1
      %p46 = scmp.ne.s32.totalorder %s41, %s43
      %p47 = scmp.eq.s32.totalorder %s12, 0
      %p48 = por %p46, %p47
      %p49 = scmp.ne.s32.totalorder %s41, %s43
      %p50 = scmp.eq.s32.totalorder %s17, 1
      %p51 = por %p49, %p50
      %p52 = scmp.ne.s32.totalorder %s43, %s44
      %p53 = scmp.eq.s32.totalorder %s17, 0
      %p54 = por %p52, %p53
      %p55 = scmp.ne.s32.totalorder %s43, %s44
      %p56 = scmp.eq.s32.totalorder %s18, 1
      %p57 = por %p55, %p56
      %p59 = scmp.ne.s32.totalorder %s44, %s58
      %p60 = scmp.eq.s32.totalorder %s18, 0
      %p61 = por %p59, %p60
      %s62 = ssub.s32 %s12, %s19
      %p63 = scmp.eq.s32.totalorder %s62, 0
      %s65 = sadd.s32 %s64, 1
      %s66 = scalar_select %p63, %s64, %s65
      %p69 = pneg %p63
      %p70 = scmp.eq.s32.totalorder %s12, 1
      %p71 = por %p69, %p70
      %p72 = scmp.ne.s32.totalorder %s64, %s67
      %p73 = scmp.eq.s32.totalorder %s12, 0
      %p74 = por %p72, %p73
      %p75 = scmp.ne.s32.totalorder %s64, %s67
      %p76 = scmp.eq.s32.totalorder %s17, 1
      %p77 = por %p75, %p76
      %p78 = scmp.ne.s32.totalorder %s67, %s68
      %p79 = scmp.eq.s32.totalorder %s17, 0
      %p80 = por %p78, %p79
      %p81 = scmp.ne.s32.totalorder %s67, %s68
      %p82 = scmp.eq.s32.totalorder %s18, 1
      %p83 = por %p81, %p82
      %p85 = scmp.ne.s32.totalorder %s68, %s84
      %p86 = scmp.eq.s32.totalorder %s18, 0
      %p87 = por %p85, %p86
      %s89 = sadd.s32 %s88, 1
      %p92 = scmp.eq.s32.totalorder %s12, 1
      %p93 = scmp.ne.s32.totalorder %s88, %s90
      %p94 = scmp.eq.s32.totalorder %s12, 0
      %p95 = por %p93, %p94
      %p96 = scmp.ne.s32.totalorder %s88, %s90
      %p97 = scmp.eq.s32.totalorder %s17, 1
      %p98 = por %p96, %p97
      %p99 = scmp.ne.s32.totalorder %s90, %s91
      %p100 = scmp.eq.s32.totalorder %s17, 0
      %p101 = por %p99, %p100
      %p102 = scmp.ne.s32.totalorder %s90, %s91
      %p103 = scmp.eq.s32.totalorder %s18, 1
      %p104 = por %p102, %p103
      %p106 = scmp.ne.s32.totalorder %s91, %s105
      %p107 = scmp.eq.s32.totalorder %s18, 0
      %p108 = por %p106, %p107
      %p109 = scmp.le.s32.totalorder 1, %s12
      %p110 = scmp.lt.s32.totalorder %s12, 3
      %p111 = pnand %p109, %p110
      %p112 = pneg %p111
      // Predicated region
      $region9: #{tpu_custom_call.1} parent=5 // pred_check
        _
      $region10: #{tpu_custom_call.1} parent=5 // pred_check_branch
        %114 = sbr.rel (%p111) target = $region12
      $region11: #{tpu_custom_call.1} parent=5 // pred_region
        %s115 = ssub.s32 %s12, 1
        // Predicated region
        $region13: #{tpu_custom_call.1} parent=11 // pred_check
          %p116 = pneg %p33
        $region14: #{tpu_custom_call.1} parent=11 // pred_check_branch
          %118 = sbr.rel (%p116) target = $region16
        $region15: #{tpu_custom_call.1} parent=11 // pred_region
          %120 = vsyncadd [#allocation7], 0
          %s122 = sshll.u32 %s0, 4
          %s123 = int_to_ptr.hbm [resolvable:$true] %s122
          %s124 = sshll.u32 [#allocation6], 4
          %s125 = int_to_ptr.vmem [resolvable:$true] %s124
          %127 = dma.hbm_to_vmem [thread:$0]  %s123, 128, %s125, [#allocation7]
        $region16: #{tpu_custom_call.1} parent=11 // pred_fallthru
          _
        // Predicated region
        $region17: #{tpu_custom_call.1} parent=11 // pred_check
          %p128 = pneg %p54
        $region18: #{tpu_custom_call.1} parent=11 // pred_check_branch
          %130 = sbr.rel (%p128) target = $region20
        $region19: #{tpu_custom_call.1} parent=11 // pred_region
          %132 = vsyncadd [#allocation10], 0
          %s134 = sshll.u32 %s1, 4
          %s135 = int_to_ptr.hbm [resolvable:$true] %s134
          %s136 = sshll.u32 [#allocation9], 4
          %s137 = int_to_ptr.vmem [resolvable:$true] %s136
          %139 = dma.hbm_to_vmem [thread:$0]  %s135, 128, %s137, [#allocation10]
        $region20: #{tpu_custom_call.1} parent=11 // pred_fallthru
          _
      $region12: #{tpu_custom_call.1} parent=5 // pred_fallthru
        _
      %p140 = scmp.lt.s32.totalorder %s12, 2
      // Predicated region
      $region21: #{tpu_custom_call.1} parent=5 // pred_check
        %p141 = pneg %p140
      $region22: #{tpu_custom_call.1} parent=5 // pred_check_branch
        %143 = sbr.rel (%p141) target = $region24
      $region23: #{tpu_custom_call.1} parent=5 // pred_region
        // Predicated region
        $region25: #{tpu_custom_call.1} parent=23 // pred_check
          %p144 = pneg %p74
        $region26: #{tpu_custom_call.1} parent=23 // pred_check_branch
          %146 = sbr.rel (%p144) target = $region28
        $region27: #{tpu_custom_call.1} parent=23 // pred_region
          %s147 = sand.u32 %s12, 1
          %s148 = scalar_lea.sflag [#allocation7], %s147
          %s149 = sand.u32 %s64, 1
          %s150 = smul.addr %s149, 8
          %s151 = scalar_lea.vmem [#allocation11], %s150
          %153 = vsyncadd %s148, 0
          %s154 = smul.addr %s12, 8
          %s155 = scalar_lea.hbm %s2, %s154
          %s157 = sshll.u32 %s155, 4
          %s158 = int_to_ptr.hbm [resolvable:$true] %s157
          %s159 = sshll.u32 %s151, 4
          %s160 = int_to_ptr.vmem [resolvable:$true] %s159
          %162 = dma.hbm_to_vmem [thread:$0]  %s158, 128, %s160, %s148
        $region28: #{tpu_custom_call.1} parent=23 // pred_fallthru
          _
      $region24: #{tpu_custom_call.1} parent=5 // pred_fallthru
        _
      %p163 = scmp.le.s32.totalorder 1, %s12
      %p164 = scmp.lt.s32.totalorder %s12, 3
      %p165 = pnand %p163, %p164
      %p166 = pneg %p165
      // Predicated region
      $region29: #{tpu_custom_call.1} parent=5 // pred_check
        _
      $region30: #{tpu_custom_call.1} parent=5 // pred_check_branch
        %168 = sbr.rel (%p165) target = $region32
      $region31: #{tpu_custom_call.1} parent=5 // pred_region
        %s169 = ssub.s32 %s12, 1
        // Predicated region
        $region33: #{tpu_custom_call.1} parent=31 // pred_check
          %p170 = pneg %p33
        $region34: #{tpu_custom_call.1} parent=31 // pred_check_branch
          %172 = sbr.rel (%p170) target = $region36
        $region35: #{tpu_custom_call.1} parent=31 // pred_region
          %174 = dma.done [#allocation7], 128
        $region36: #{tpu_custom_call.1} parent=31 // pred_fallthru
          _
        // Predicated region
        $region37: #{tpu_custom_call.1} parent=31 // pred_check
          %p175 = pneg %p54
        $region38: #{tpu_custom_call.1} parent=31 // pred_check_branch
          %177 = sbr.rel (%p175) target = $region40
        $region39: #{tpu_custom_call.1} parent=31 // pred_region
          %179 = dma.done [#allocation10], 128
        $region40: #{tpu_custom_call.1} parent=31 // pred_fallthru
          _
        %s180 = sand.u32 %s17, 1
        %s181 = scalar_lea.sflag [#allocation7], %s180
        %s182 = sand.u32 %s67, 1
        %s183 = smul.addr %s182, 8
        %s184 = scalar_lea.vmem [#allocation11], %s183
        // Predicated region
        $region41: #{tpu_custom_call.1} parent=31 // pred_check
          %p185 = pneg %p80
        $region42: #{tpu_custom_call.1} parent=31 // pred_check_branch
          %187 = sbr.rel (%p185) target = $region44
        $region43: #{tpu_custom_call.1} parent=31 // pred_region
          %189 = dma.done %s181, 128
        $region44: #{tpu_custom_call.1} parent=31 // pred_fallthru
          _
        %p190 = pneg %p33
        %p191 = pneg %p30
        %p192 = pneg %p54
        %p193 = pneg %p51
        %s194 = sand.u32 %s17, 1
        %s195 = scalar_lea.sflag [#allocation7], %s194
        %s196 = sand.u32 %s67, 1
        %s197 = smul.addr %s196, 8
        %s198 = scalar_lea.vmem [#allocation11], %s197
        %p199 = pneg %p80
        %p200 = pneg %p77
        %p201 = pneg %p101
        %p202 = pneg %p98
        %p203 = scmp.eq.s32.totalorder %s17, 0
        // Predicated region
        $region45: #{tpu_custom_call.1} parent=31 // pred_check
          %p204 = pneg %p203
        $region46: #{tpu_custom_call.1} parent=31 // pred_check_branch
          %206 = sbr.rel (%p204) target = $region48
        $region47: #{tpu_custom_call.1} parent=31 // pred_region
          %v207 = vld [vmem:[#allocation6] sm:$0xff]
          %v208 = vld [vmem:[#allocation9] sm:$0xff]
          %v209 = vmul.f32 %v207, %v207
          %vm210 = vcmask 261120
          %v211 = vsel %vm210, %v209, 0.0
          %212 = vadd.xlane.f32.xlu0 %v211
          %v213 = vpop.xlane.xlu0 %212
          %v214 = vmax.f32 %v213, 1e-24
          %v215 = vrsqrt.pop %v214
          %v216 = vmul.f32 %v215, %v214
          %v217 = vmul.f32 %v216, %v215
          %v218 = vmul.f32 0.5, %v217
          %v219 = vsub.f32 1.5, %v218
          %v220 = vmul.f32 %v215, %v219
          %vm221 = vweird.f32 %v214
          %vm222 = vweird.f32 %v215
          %vm223 = vmor %vm221, %vm222
          %v224 = vsel %vm223, %v215, %v220
          %v225 = vmul.f32 %v224, 20.0
          %v226 = vmul.f32 %v207, %v225
          %v227 = vmul.f32 %v208, %v208
          %v228 = vsel %vm210, %v227, 0.0
          %229 = vadd.xlane.f32.xlu0 %v228
          %v230 = vpop.xlane.xlu0 %229
          %v231 = vmax.f32 %v230, 1e-24
          %v232 = vrsqrt.pop %v231
          %v233 = vmul.f32 %v232, %v231
          %v234 = vmul.f32 %v233, %v232
          %v235 = vmul.f32 0.5, %v234
          %v236 = vsub.f32 1.5, %v235
          %v237 = vmul.f32 %v232, %v236
          %vm238 = vweird.f32 %v231
          %vm239 = vweird.f32 %v232
          %vm240 = vmor %vm238, %vm239
          %v241 = vsel %vm240, %v232, %v237
          %v242 = vmul.f32 %v208, %v241
          %243 = vst.msk [vmem:[#allocation2] sm:$0xff] %vm210, %v226
          %v244 = vmul.f32 %v226, %v242
          %v245 = vsel %vm210, %v244, 0.0
          %246 = vadd.xlane.f32.xlu0 %v245
          %v247 = vpop.xlane.xlu0 %246
          %vm248 = vcmask 7168
          %249 = vst.msk [vmem:[#allocation5] sm:$0xff] %vm248, %v247
          %v251 = vsel %vm210, %v226, 0
          %v254 = vsel %vm210, %v242, 0
          %256 = vmatpush.xpose.msra.mxu0 0.0
          %257 = vmatpush.xpose.msra.mxu0 0.0
          %258 = vmatpush.xpose.msra.mxu0 0.0
          %259 = vmatpush.xpose.msra.mxu0 0.0
          %260 = vmatpush.xpose.msra.mxu0 0.0
          %261 = vmatpush.xpose.msra.mxu0 0.0
          %262 = vmatpush.xpose.msra.mxu0 0.0
          %263 = vmatpush.xpose.msra.mxu0 0.0
          %264 = vmatpush.xpose.msra.mxu0 0.0
          %265 = vmatpush.xpose.msra.mxu0 0.0
          %266 = vmatpush.xpose.msra.mxu0 0.0
          %267 = vmatpush.xpose.msra.mxu0 0.0
          %268 = vmatpush.xpose.msra.mxu0 0.0
          %269 = vmatpush.xpose.msra.mxu0 0.0
          %270 = vmatpush.xpose.msra.mxu0 0.0
          %271 = vmatpush.xpose.msra.mxu0 %v254
          %272 = vmatmul.f32.gmra.mxu0 %v251
          %v273 = vpop.f32.mrf.mxu0
          %v274 = vadd.f32 0.0, %v273
          %275 = vdwg.mxu0
          %vm276 = vcmask 64512
          %v277 = vsel %vm276, %v274, -inf
          %278 = vmax.xlane.f32.xlu0 %v277
          %v279 = vpop.xlane.xlu0 %278
          %280 = vst.msk [vmem:[#allocation3] sm:$0xff] %vm248, %v279
          %v281 = vsub.f32 %v274, %v279
          %v282 = vmul.f32 %v281, 1.442695
          %v283 = vpow.pop %v282
          %v284 = vsel %vm276, %v283, 0.0
          %285 = vadd.xlane.f32.xlu0 %v284
          %v286 = vpop.xlane.xlu0 %285
          %287 = vst.msk [vmem:[#allocation4] sm:$0xff] %vm248, %v286
        $region48: #{tpu_custom_call.1} parent=31 // pred_fallthru
          _
        %v288 = vld [vmem:[%s184] sm:$0xff]
        %v289 = vmul.f32 %v288, %v288
        %vm290 = vcmask 261120
        %v291 = vsel %vm290, %v289, 0.0
        %292 = vadd.xlane.f32.xlu0 %v291
        %v293 = vpop.xlane.xlu0 %292
        %v294 = vmax.f32 %v293, 1e-24
        %v295 = vrsqrt.pop %v294
        %v296 = vmul.f32 %v295, %v294
        %v297 = vmul.f32 %v296, %v295
        %v298 = vmul.f32 0.5, %v297
        %v299 = vsub.f32 1.5, %v298
        %v300 = vmul.f32 %v295, %v299
        %vm301 = vweird.f32 %v294
        %vm302 = vweird.f32 %v295
        %vm303 = vmor %vm301, %vm302
        %v304 = vsel %vm303, %v295, %v300
        %v305 = vmul.f32 %v288, %v304
        %v306 = vld [vmem:[#allocation2] sm:$0xff]
        %v308 = vsel %vm290, %v306, 0
        %v311 = vsel %vm290, %v305, 0
        %313 = vmatpush.xpose.msra.mxu0 0.0
        %314 = vmatpush.xpose.msra.mxu0 0.0
        %315 = vmatpush.xpose.msra.mxu0 0.0
        %316 = vmatpush.xpose.msra.mxu0 0.0
        %317 = vmatpush.xpose.msra.mxu0 0.0
        %318 = vmatpush.xpose.msra.mxu0 0.0
        %319 = vmatpush.xpose.msra.mxu0 0.0
        %320 = vmatpush.xpose.msra.mxu0 0.0
        %321 = vmatpush.xpose.msra.mxu0 0.0
        %322 = vmatpush.xpose.msra.mxu0 0.0
        %323 = vmatpush.xpose.msra.mxu0 0.0
        %324 = vmatpush.xpose.msra.mxu0 0.0
        %325 = vmatpush.xpose.msra.mxu0 0.0
        %326 = vmatpush.xpose.msra.mxu0 0.0
        %327 = vmatpush.xpose.msra.mxu0 0.0
        %328 = vmatpush.xpose.msra.mxu0 %v311
        %329 = vmatmul.f32.gmra.mxu0 %v308
        %v330 = vpop.f32.mrf.mxu0
        %v331 = vadd.f32 0.0, %v330
        %332 = vdwg.mxu0
        %v333 = vld [vmem:[#allocation3] sm:$0xff]
        %v334 = vld [vmem:[#allocation4] sm:$0xff]
        %vm335 = vcmask 64512
        %v336 = vsel %vm335, %v331, -inf
        %337 = vmax.xlane.f32.xlu0 %v336
        %v338 = vpop.xlane.xlu0 %337
        %v339 = vmax.f32 %v333, %v338
        %v340 = vsub.f32 %v333, %v339
        %v341 = vmul.f32 %v340, 1.442695
        %v342 = vpow.pop %v341
        %v343 = vmul.f32 %v334, %v342
        %345 = vset.pattern.permute.xlu0 0
        %346 = vperm.xlu0 %345, %v339
        %v347 = vpop.permute.xlu0 %346
        %v349 = vsub.f32 %v331, %v347
        %v350 = vmul.f32 %v349, 1.442695
        %v351 = vpow.pop %v350
        %v352 = vsel %vm335, %v351, 0.0
        %353 = vadd.xlane.f32.xlu0 %v352
        %v354 = vpop.xlane.xlu0 %353
        %v355 = vadd.f32 %v343, %v354
        %vm356 = vcmask 7168
        %357 = vst.msk [vmem:[#allocation4] sm:$0xff] %vm356, %v355
        %358 = vst.msk [vmem:[#allocation3] sm:$0xff] %vm356, %v339
        %p359 = scmp.eq.s32.totalorder %s17, 1
        // Predicated region
        $region49: #{tpu_custom_call.1} parent=31 // pred_check
          %p360 = pneg %p359
        $region50: #{tpu_custom_call.1} parent=31 // pred_check_branch
          %362 = sbr.rel (%p360) target = $region52
        $region51: #{tpu_custom_call.1} parent=31 // pred_region
          %v363 = vld [vmem:[#allocation4] sm:$0xff]
          %v364 = vlog2.pop %v363
          %v365 = vmul.f32 %v364, 0.6931472
          %v366 = vld [vmem:[#allocation3] sm:$0xff]
          %v367 = vadd.f32 %v365, %v366
          %v368 = vld [vmem:[#allocation5] sm:$0xff]
          %v369 = vsub.f32 %v367, %v368
          %v370 = vsel %vm356, %v369, 0.0
          %371 = vadd.xlane.f32.xlu0 %v370
          %v372 = vpop.xlane.xlu0 %371
          %v373 = vrot.slane %v372, 4
          %v374 = vadd.f32 %v372, %v373
          %v375 = vrot.slane %v374, 2
          %v376 = vadd.f32 %v374, %v375
          %v377 = vrot.slane %v376, 1
          %v378 = vadd.f32 %v376, %v377
          %s379 = vtos %v378
          %v380 = vrcp.pop 8.0
          %v381 = vmul.f32 8.0, %v380
          %v382 = vsub.f32 1.0, %v381
          %v383 = vmul.f32 %v380, %v382
          %v384 = vadd.f32 %v380, %v383
          %vm385 = vweird.f32 %v380
          %v386 = vsel %vm385, %v380, %v384
          %s387 = vtos %v386
          %s388 = smul.f32 %s379, %s387
          %s389 = scalar_lea.smem [#allocation12], 0
          %390 = sst [smem:[%s389]] %s388
        $region52: #{tpu_custom_call.1} parent=31 // pred_fallthru
          _
        // Predicated region
        $region53: #{tpu_custom_call.1} parent=31 // pred_check
          %p391 = pneg %p98
        $region54: #{tpu_custom_call.1} parent=31 // pred_check_branch
          %393 = sbr.rel (%p391) target = $region56
        $region55: #{tpu_custom_call.1} parent=31 // pred_region
          %395 = vsyncadd [#allocation8], 0
          %s397 = sshll.u32 %s3, 4
          %s398 = int_to_ptr.hbm [resolvable:$true] %s397
          %400 = dma.smem_to_hbm [#allocation12], 16, %s398, [#allocation8]
        $region56: #{tpu_custom_call.1} parent=31 // pred_fallthru
          _
        // Predicated region
        $region57: #{tpu_custom_call.1} parent=31 // pred_check
          %p401 = pneg %p98
        $region58: #{tpu_custom_call.1} parent=31 // pred_check_branch
          %403 = sbr.rel (%p401) target = $region60
        $region59: #{tpu_custom_call.1} parent=31 // pred_region
          %405 = dma.done [#allocation8], 16
        $region60: #{tpu_custom_call.1} parent=31 // pred_fallthru
          _
        %406 = sfence
      $region32: #{tpu_custom_call.1} parent=5 // pred_fallthru
        _
      %p407 = scmp.le.s32.totalorder 2, %s12
      // Predicated region
      $region61: #{tpu_custom_call.1} parent=5 // pred_check
        %p408 = pneg %p407
      $region62: #{tpu_custom_call.1} parent=5 // pred_check_branch
        %410 = sbr.rel (%p408) target = $region64
      $region63: #{tpu_custom_call.1} parent=5 // pred_region
        %s411 = ssub.s32 %s12, 2
      $region64: #{tpu_custom_call.1} parent=5 // pred_fallthru
        _
    $region6: #{tpu_custom_call.1} parent=1 // loop_footer
      %s16 = sadd.s32 1, %s12
    $region7: #{tpu_custom_call.1} parent=1 // loop_footer_branch
      %11 = sbr.rel target = $region3
    $region8: #{tpu_custom_call.1} parent=1 // loop_exit
      _
    %412 = vsyncpa [#allocation7], 1
    %s413 = scalar_lea.sflag [#allocation7], 1
    %414 = vsyncpa %s413, 1
    %415 = vsyncpa [#allocation10], 1
    %416 = vsyncpa [#allocation8], 1
    %s417 = scalar_lea.sflag [#allocation8], 1
    %418 = vsyncpa %s417, 1

</llo_original>
